<compile_context>
chip_gen: v7x
topology: tpu7x:2x2x1
jax: 0.10.0
libtpu: 0.0.40
codegen_flags: <defaults>
</compile_context>

<pallas_src>
import jax
import jax.numpy as jnp
from jax.experimental import pallas as pl
from jax.experimental.pallas import tpu as pltpu


def _round_up(x, m):
    return ((x + m - 1) // m) * m


# --------------------------- conv 3x3 / stride 2 ---------------------------

def _conv_matmul_kernel(p_ref, w_ref, b_ref, o_ref, acc_ref):
    # p_ref:   (TP, TK)  im2col patch tile (batch dim squeezed)
    # w_ref:   (TK, TN)  folded weight tile
    # b_ref:   (1, TN)   bias tile
    # o_ref:   (TP, TN)  output tile (batch dim squeezed)
    # acc_ref: (TP, TN)  f32 accumulator, carried across the K grid axis
    @pl.when(pl.program_id(3) == 0)
    def _init():
        acc_ref[...] = jnp.zeros_like(acc_ref)

    acc_ref[...] += jnp.dot(p_ref[...], w_ref[...],
                            preferred_element_type=jnp.float32)

    @pl.when(pl.program_id(3) == pl.num_programs(3) - 1)
    def _finalize():
        out = acc_ref[...] + b_ref[...].astype(jnp.float32)
        o_ref[...] = out.astype(o_ref.dtype)


def _downsample_conv(x, weight, bias, matmul_dtype=None):
    """3x3 conv, stride 2, padding 1 (PyTorch Conv2d semantics), NCHW in/out."""
    B, Cin, H, W = x.shape
    Cout = weight.shape[0]
    stride, pad, ksz = 2, 1, 3
    Ho = (H + 2 * pad - ksz) // stride + 1
    Wo = (W + 2 * pad - ksz) // stride + 1
    P = Ho * Wo
    K = ksz * ksz * Cin

    if bias is None:
        bias = jnp.zeros((Cout,), dtype=x.dtype)

    # --- glue: NCHW -> NHWC, zero-pad spatial, im2col (tap-major, then chan) ---
    # TODO(synk): the im2col patch tensor is an extra HBM round trip (~2.25x the
    # input); a halo-aware manual-DMA variant could feed the matmul straight
    # from the padded NHWC input.
    xh = jnp.transpose(x, (0, 2, 3, 1))
    xp = jnp.pad(xh, ((0, 0), (pad, pad), (pad, pad), (0, 0)))
    taps = [xp[:, kh:kh + stride * Ho:stride, kw:kw + stride * Wo:stride, :]
            for kh in range(ksz) for kw in range(ksz)]
    patches = jnp.stack(taps, axis=3).reshape(B, P, K)

    # (Cout, Cin, 3, 3) -> (kh, kw, Cin, Cout) -> (K, Cout): matches patch K order.
    wk = jnp.transpose(weight, (2, 3, 1, 0)).reshape(K, Cout)
    bk = bias.reshape(1, Cout)

    # --- tile sizes: MXU-shaped, lane-dense output, sized for v7x VMEM too ---
    TN = 128 if Cout <= 128 else 256        # lane-dense output tile (>=128)
    TK = min(512, _round_up(K, 128))        # reduction tile, multiple of 128
    TP = min(512, _round_up(P, 8))          # row tile, multiple of 8 sublanes
    Np = _round_up(Cout, TN)
    Kp = _round_up(K, TK)
    Pp = _round_up(P, TP)

    patches = jnp.pad(patches, ((0, 0), (0, Pp - P), (0, Kp - K)))
    wk = jnp.pad(wk, ((0, Kp - K), (0, Np - Cout)))
    bk = jnp.pad(bk, ((0, 0), (0, Np - Cout)))

    if matmul_dtype is not None:            # e.g. jnp.bfloat16: ~2x MXU rate,
        patches = patches.astype(matmul_dtype)   # f32 accumulation kept.
        wk = wk.astype(matmul_dtype)

    isz = jnp.dtype(patches.dtype).itemsize
    cost = pl.CostEstimate(
        flops=2 * B * Pp * Kp * Np,
        transcendentals=0,
        bytes_accessed=(B * Pp * Kp * isz + Kp * Np * isz
                        + B * Pp * Np * jnp.dtype(x.dtype).itemsize),
    )

    out = pl.pallas_call(
        _conv_matmul_kernel,
        out_shape=jax.ShapeDtypeStruct((B, Pp, Np), x.dtype),
        grid=(B, Pp // TP, Np // TN, Kp // TK),
        in_specs=[
            pl.BlockSpec((pl.Squeezed(), TP, TK), lambda b, p, n, k: (b, p, k)),
            pl.BlockSpec((TK, TN), lambda b, p, n, k: (k, n)),
            pl.BlockSpec((1, TN), lambda b, p, n, k: (0, n)),
        ],
        out_specs=pl.BlockSpec((pl.Squeezed(), TP, TN),
                               lambda b, p, n, k: (b, p, n)),
        scratch_shapes=[pltpu.VMEM((TP, TN), jnp.float32)],
        compiler_params=pltpu.CompilerParams(
            dimension_semantics=("parallel", "parallel", "parallel", "arbitrary"),
            vmem_limit_bytes=32 * 1024 * 1024,
        ),
        cost_estimate=cost,
    )(patches, wk, bk)

    out = out[:, :P, :Cout].reshape(B, Ho, Wo, Cout)
    return jnp.transpose(out, (0, 3, 1, 2))


# ------------------------------- avg pool 2x2 -------------------------------

def _avgpool_kernel(x_ref, a_ref, o_ref):
    # x_ref: (TR, 2*W)  two input rows per pooled output row, back to back
    # a_ref: (2*W, Wo)  0/1 pooling matrix: column j gathers the 2x2 window j
    # o_ref: (TR, Wo)
    s = jnp.dot(x_ref[...].astype(jnp.float32), a_ref[...],
                preferred_element_type=jnp.float32)
    o_ref[...] = (s * 0.25).astype(o_ref.dtype)


def _downsample_avgpool(x):
    """AvgPool2d(kernel_size=2, stride=2), NCHW in/out.  No layout transposes."""
    B, C, H, W = x.shape
    if H % 2 or W % 2:
        # PyTorch floor behaviour: drop trailing odd row/col.
        H, W = 2 * (H // 2), 2 * (W // 2)
        x = x[:, :, :H, :W]
    Ho, Wo = H // 2, W // 2
    R = C * Ho

    # Free row-major reshape: row r = c*Ho + ho holds input rows (2ho, 2ho+1)
    # concatenated, i.e. lane index l = hs*W + w.
    xr = x.reshape(B, R, 2 * W)

    # Pooling matrix A[l, j] = 1 iff (l mod W) // 2 == j (covers both h-rows).
    lidx = jnp.arange(2 * W) % W
    a_mat = (lidx[:, None] // 2 == jnp.arange(Wo)[None, :]).astype(jnp.float32)

    # Row tile: largest multiple-of-8 tile (<= 512) that divides R.
    TR = R
    for cand in (512, 256, 128, 64, 32, 16, 8):
        if R % cand == 0:
            TR = cand
            break

    out = pl.pallas_call(
        _avgpool_kernel,
        out_shape=jax.ShapeDtypeStruct((B, R, Wo), x.dtype),
        grid=(B, R // TR),
        in_specs=[
            pl.BlockSpec((pl.Squeezed(), TR, 2 * W), lambda b, r: (b, r, 0)),
            pl.BlockSpec((2 * W, Wo), lambda b, r: (0, 0)),
        ],
        out_specs=pl.BlockSpec((pl.Squeezed(), TR, Wo), lambda b, r: (b, r, 0)),
        compiler_params=pltpu.CompilerParams(
            dimension_semantics=("parallel", "parallel"),
            vmem_limit_bytes=32 * 1024 * 1024,
        ),
    )(xr, a_mat)

    # Free reshape back to NCHW.
    return out.reshape(B, C, Ho, Wo)


# --------------------------------- wrapper ----------------------------------

def downsample(x, use_conv, weight=None, bias=None, matmul_dtype=None):
    """Forward pass of Downsample(channels, use_conv, dims=2, padding=1)."""
    if use_conv:
        return _downsample_conv(x, weight, bias, matmul_dtype=matmul_dtype)
    return _downsample_avgpool(x)


if __name__ == "__main__":
    key = jax.random.PRNGKey(0)
    kx, kw, kb = jax.random.split(key, 3)

    B, C, H, W = 2, 4, 16, 16
    Cout = 4  # out_channels defaults to channels

    x = jax.random.normal(kx, (B, C, H, W), dtype=jnp.float32)
    # Deterministic synthetic parameters (Conv2d(C, Cout, 3, stride=2, padding=1)).
    weight = jax.random.normal(kw, (Cout, C, 3, 3), dtype=jnp.float32) * 0.1
    bias = jax.random.normal(kb, (Cout,), dtype=jnp.float32) * 0.1

    # use_conv=True path
    y = downsample(x, use_conv=True, weight=weight, bias=bias)
    y = jax.block_until_ready(y)
    ref = jax.lax.conv_general_dilated(
        x, weight, window_strides=(2, 2), padding=((1, 1), (1, 1)),
        dimension_numbers=("NCHW", "OIHW", "NCHW"), precision="highest",
    ) + bias[None, :, None, None]
    assert y.shape == (B, Cout, H // 2, W // 2)
    assert jnp.allclose(y, ref, atol=1e-4, rtol=1e-4), "conv path mismatch"

    # use_conv=False path (avg pool 2x2)
    yp = downsample(x, use_conv=False)
    yp = jax.block_until_ready(yp)
    ref_p = x.reshape(B, C, H // 2, 2, W // 2, 2).mean(axis=(3, 5))
    assert yp.shape == (B, C, H // 2, W // 2)
    assert jnp.allclose(yp, ref_p, atol=1e-5, rtol=1e-5), "avgpool path mismatch"

    print("KERNEL_OK")
</pallas_src>

<mosaic_0001>
module attributes {stable_mosaic.version = 11 : i64} {
  func.func @_conv_matmul_kernel(%arg0: i32, %arg1: i32, %arg2: i32, %arg3: i32, %arg4: memref<1x64x128xf32, #tpu.memory_space<vmem>>, %arg5: memref<128x128xf32, #tpu.memory_space<vmem>>, %arg6: memref<1x128xf32, #tpu.memory_space<vmem>>, %arg7: memref<1x64x128xf32, #tpu.memory_space<vmem>>, %arg8: memref<64x128xf32, #tpu.memory_space<vmem>>) attributes {dimension_semantics = [#tpu.dimension_semantics<parallel>, #tpu.dimension_semantics<parallel>, #tpu.dimension_semantics<parallel>, #tpu.dimension_semantics<arbitrary>], iteration_bounds = array<i64: 2, 1, 1, 1>, scalar_prefetch = 0 : i64, scratch_operands = 1 : i64, tpu.core_type = #tpu.core_type<tc>, window_params = [{transform_indices = @transform_0, window_bounds = array<i64: 1, 64, 128>}, {transform_indices = @transform_1, window_bounds = array<i64: 128, 128>}, {transform_indices = @transform_2, window_bounds = array<i64: 1, 128>}, {transform_indices = @transform_3, window_bounds = array<i64: 1, 64, 128>}]} {
    %c0_i32 = arith.constant 0 : i32
    %0 = arith.cmpi eq, %arg3, %c0_i32 : i32
    %1 = arith.extui %0 : i1 to i32
    %c0_i32_0 = arith.constant 0 : i32
    %2 = arith.cmpi ne, %1, %c0_i32_0 : i32
    scf.if %2 {
      %cst_11 = arith.constant 0.000000e+00 : f32
      %13 = vector.broadcast %cst_11 : f32 to vector<64x128xf32>
      %c0_12 = arith.constant 0 : index
      %c0_13 = arith.constant 0 : index
      %14 = vector.load %arg8[%c0_12, %c0_13] : memref<64x128xf32, #tpu.memory_space<vmem>>, vector<64x128xf32>
      tpu.vector_store %arg8[%c0_12, %c0_13], %13 {strides = array<i32>} : memref<64x128xf32, #tpu.memory_space<vmem>>, vector<64x128xf32>,
    } else {
    }
    %c0 = arith.constant 0 : index
    %c0_1 = arith.constant 0 : index
    %3 = vector.load %arg8[%c0, %c0_1] : memref<64x128xf32, #tpu.memory_space<vmem>>, vector<64x128xf32>
    %c0_2 = arith.constant 0 : index
    %c0_3 = arith.constant 0 : index
    %c0_4 = arith.constant 0 : index
    %4 = vector.load %arg4[%c0_2, %c0_3, %c0_4] : memref<1x64x128xf32, #tpu.memory_space<vmem>>, vector<1x64x128xf32>
    %5 = vector.shape_cast %4 : vector<1x64x128xf32> to vector<64x128xf32>
    %c0_5 = arith.constant 0 : index
    %c0_6 = arith.constant 0 : index
    %6 = vector.load %arg5[%c0_5, %c0_6] : memref<128x128xf32, #tpu.memory_space<vmem>>, vector<128x128xf32>
    %cst = arith.constant dense<0.000000e+00> : vector<64x128xf32>
    %7 = tpu.matmul %5, %6, %cst {dimension_numbers = #tpu.dot_dimension_numbers<[1], [0], [0], [1], [0, 0, 1, 1], [], []>} : vector<64x128xf32>, vector<128x128xf32>, vector<64x128xf32> -> vector<64x128xf32>
    %8 = arith.addf %3, %7 : vector<64x128xf32>
    %c0_7 = arith.constant 0 : index
    %c0_8 = arith.constant 0 : index
    %9 = vector.load %arg8[%c0_7, %c0_8] : memref<64x128xf32, #tpu.memory_space<vmem>>, vector<64x128xf32>
    tpu.vector_store %arg8[%c0_7, %c0_8], %8 {strides = array<i32>} : memref<64x128xf32, #tpu.memory_space<vmem>>, vector<64x128xf32>,
    %c0_i32_9 = arith.constant 0 : i32
    %10 = arith.cmpi eq, %arg3, %c0_i32_9 : i32
    %11 = arith.extui %10 : i1 to i32
    %c0_i32_10 = arith.constant 0 : i32
    %12 = arith.cmpi ne, %11, %c0_i32_10 : i32
    scf.if %12 {
      %c0_11 = arith.constant 0 : index
      %c0_12 = arith.constant 0 : index
      %13 = vector.load %arg8[%c0_11, %c0_12] : memref<64x128xf32, #tpu.memory_space<vmem>>, vector<64x128xf32>
      %c0_13 = arith.constant 0 : index
      %c0_14 = arith.constant 0 : index
      %14 = vector.load %arg6[%c0_13, %c0_14] : memref<1x128xf32, #tpu.memory_space<vmem>>, vector<1x128xf32>
      %15 = vector.broadcast %14 : vector<1x128xf32> to vector<64x128xf32>
      %16 = arith.addf %13, %15 : vector<64x128xf32>
      %c0_15 = arith.constant 0 : index
      %c0_16 = arith.constant 0 : index
      %c0_17 = arith.constant 0 : index
      %17 = vector.load %arg7[%c0_15, %c0_16, %c0_17] : memref<1x64x128xf32, #tpu.memory_space<vmem>>, vector<1x64x128xf32>
      %18 = vector.shape_cast %17 : vector<1x64x128xf32> to vector<64x128xf32>
      %19 = vector.shape_cast %16 : vector<64x128xf32> to vector<1x64x128xf32>
      tpu.vector_store %arg7[%c0_15, %c0_16, %c0_17], %19 {strides = array<i32>} : memref<1x64x128xf32, #tpu.memory_space<vmem>>, vector<1x64x128xf32>,
    } else {
    }
    return
  }
  func.func @transform_0(%arg0: i32, %arg1: i32, %arg2: i32, %arg3: i32) -> (i32, i32, i32) {
    %c0_i32 = arith.constant 0 : i32
    return %arg0, %arg1, %arg3 : i32, i32, i32
  }
  func.func @transform_1(%arg0: i32, %arg1: i32, %arg2: i32, %arg3: i32) -> (i32, i32) {
    %c0_i32 = arith.constant 0 : i32
    return %arg3, %arg2 : i32, i32
  }
  func.func @transform_2(%arg0: i32, %arg1: i32, %arg2: i32, %arg3: i32) -> (i32, i32) {
    %c0_i32 = arith.constant 0 : i32
    %c0_i32_0 = arith.constant 0 : i32
    return %c0_i32, %arg2 : i32, i32
  }
  func.func @transform_3(%arg0: i32, %arg1: i32, %arg2: i32, %arg3: i32) -> (i32, i32, i32) {
    %c0_i32 = arith.constant 0 : i32
    return %arg0, %arg1, %arg2 : i32, i32, i32
  }
}

</mosaic_0001>

<llo_original>
// kernel: tpu_custom_call.1
$region0: #{tpu_custom_call.1}
  #allocation0 [shape = 'u32[]', space=smem, size = 0x4, offset = 0x4, fixed_abs, tag = 'smem constant byte address 0x4 - core index']
  #allocation1 [shape = 'u32[144,128]{1,0:T(1,128)}', space=vmem, size = 0x12000, scoped, tag = 'internal scratch']
  #allocation2 [shape = 'f32[64,128]{1,0:T(8,128)}', space=vmem, size = 0x8000, scoped, tag = 'scratch operand']
  %s0 = inlined_call_operand.hbm [shape: f32[2,64,128], index: 0, kind: input, shape index: {}]
  %s1 = inlined_call_operand.hbm [shape: f32[128,128], index: 1, kind: input, shape index: {}]
  %s2 = inlined_call_operand.vmem [shape: f32[1,128], index: 2, kind: input, shape index: {}]
  %s3 = inlined_call_operand.hbm [shape: f32[2,64,128], index: 3, kind: output, shape index: {}]
  %s4 = sld [smem:[#allocation0]]
  $region61: #{tpu_custom_call.1} parent=0
    _
  %s6 = ssub.s32 1, %s4
  %s7 = scalar_select 0, %s6, %s4
  $region1: #{tpu_custom_call.1} parent=0
    #allocation3 [shape = 'u8[65536]{0}', space=vmem, size = 0x10000, scoped, tag = 'input window, operand 0']
    #allocation4 [shape = 's32[2]{0}', space=sflag, size = 0x8, scoped, tag = 'scoped memory for tpu_custom_call.1']
    #allocation5 [shape = 's32[2]{0}', space=sflag, size = 0x8, scoped, tag = 'scoped memory for tpu_custom_call.1']
    #allocation6 [shape = 'u8[65536]{0}', space=vmem, size = 0x10000, scoped, tag = 'input window, operand 1, single buffered']
    #allocation7 [shape = 's32[1]{0}', space=sflag, size = 0x4, scoped, tag = 'scoped memory for tpu_custom_call.1']
    #allocation8 [shape = 'u8[65536]{0}', space=vmem, size = 0x10000, scoped, tag = 'output window, operand 0']
    %8 = vsyncpa [#allocation4], 0
    %s9 = scalar_lea.sflag [#allocation4], 1
    %10 = vsyncpa %s9, 0
    %11 = vsyncpa [#allocation7], 0
    %12 = vsyncpa [#allocation5], 0
    %s13 = scalar_lea.sflag [#allocation5], 1
    %14 = vsyncpa %s13, 0
    loop: start=0, step=1, limit=4
    $region2: #{tpu_custom_call.1} parent=1 // loop_pre_header
      _
    $region3: #{tpu_custom_call.1} parent=1 // loop_header
      %s16 = sphi 0, %s20
      %p17 = scmp.ge.s32.totalorder %s16, 4
      %s23 = sphi 0, %s49
      %s24 = sphi 0, %s45
      %s25 = sphi 0, %s41
      %s26 = sphi 0, %s37
      %s27 = sphi 0, %s23
      %s28 = sphi 0, %s24
      %s29 = sphi 0, %s25
      %s30 = sphi 0, %s26
      %s31 = sphi 0, %s27
      %s32 = sphi 0, %s28
      %s33 = sphi 0, %s29
      %s34 = sphi 0, %s30
      %s56 = sphi 0, %s58
      %s59 = sphi 0, %s56
      %s60 = sphi 0, %s59
      %s76 = sphi 0, %s60
      %s84 = sphi 0, %s86
      %s87 = sphi 0, %s84
      %s88 = sphi 0, %s87
      %s104 = sphi 0, %s88
      %s110 = sphi 0, %s112
      %s113 = sphi 0, %s110
      %s114 = sphi 0, %s113
      %s130 = sphi 0, %s114
      %s140 = sphi 0, %s142
      %s143 = sphi 0, %s140
      %s144 = sphi 0, %s143
      %s160 = sphi 0, %s144
    $region4: #{tpu_custom_call.1} parent=1 // loop_header_branch
      %19 = sbr.rel (%p17) target = $region8
    $region5: #{tpu_custom_call.1} parent=1 // loop_body
      %s21 = ssub.s32 %s16, 1
      %s22 = ssub.s32 %s16, 2
      %s35 = sadd.s32 1, %s26
      %p36 = scmp.ge.s32.totalorder %s35, 1
      %s37 = scalar_select %p36, 0, %s35
      %s38 = sadd.s32 1, %s25
      %s39 = scalar_select %p36, %s38, %s25
      %p40 = scmp.ge.s32.totalorder %s39, 1
      %s41 = scalar_select %p40, 0, %s39
      %s42 = sadd.s32 1, %s24
      %s43 = scalar_select %p40, %s42, %s24
      %p44 = scmp.ge.s32.totalorder %s43, 1
      %s45 = scalar_select %p44, 0, %s43
      %s46 = sadd.s32 1, %s23
      %s47 = scalar_select %p44, %s46, %s23
      %p48 = scmp.ge.s32.totalorder %s47, 2
      %s49 = scalar_select %p48, 0, %s47
      %s50 = ssub.s32 %s23, %s49
      %s51 = ssub.s32 %s24, %s45
      %s52 = sor.u32 %s50, %s51
      %s53 = ssub.s32 %s26, %s37
      %s54 = sor.u32 %s52, %s53
      %p55 = scmp.eq.s32.totalorder %s54, 0
      %s57 = sadd.s32 %s56, 1
      %s58 = scalar_select %p55, %s56, %s57
      %p61 = pneg %p55
      %p62 = scmp.eq.s32.totalorder %s16, 1
      %p63 = por %p61, %p62
      %p64 = scmp.ne.s32.totalorder %s56, %s59
      %p65 = scmp.eq.s32.totalorder %s16, 0
      %p66 = por %p64, %p65
      %p67 = scmp.ne.s32.totalorder %s56, %s59
      %p68 = scmp.eq.s32.totalorder %s21, 1
      %p69 = por %p67, %p68
      %p70 = scmp.ne.s32.totalorder %s59, %s60
      %p71 = scmp.eq.s32.totalorder %s21, 0
      %p72 = por %p70, %p71
      %p73 = scmp.ne.s32.totalorder %s59, %s60
      %p74 = scmp.eq.s32.totalorder %s22, 1
      %p75 = por %p73, %p74
      %p77 = scmp.ne.s32.totalorder %s60, %s76
      %p78 = scmp.eq.s32.totalorder %s22, 0
      %p79 = por %p77, %p78
      %s80 = ssub.s32 %s26, %s37
      %s81 = ssub.s32 %s25, %s41
      %s82 = sor.u32 %s80, %s81
      %p83 = scmp.eq.s32.totalorder %s82, 0
      %s85 = sadd.s32 %s84, 1
      %s86 = scalar_select %p83, %s84, %s85
      %p89 = pneg %p83
      %p90 = scmp.eq.s32.totalorder %s16, 1
      %p91 = por %p89, %p90
      %p92 = scmp.ne.s32.totalorder %s84, %s87
      %p93 = scmp.eq.s32.totalorder %s16, 0
      %p94 = por %p92, %p93
      %p95 = scmp.ne.s32.totalorder %s84, %s87
      %p96 = scmp.eq.s32.totalorder %s21, 1
      %p97 = por %p95, %p96
      %p98 = scmp.ne.s32.totalorder %s87, %s88
      %p99 = scmp.eq.s32.totalorder %s21, 0
      %p100 = por %p98, %p99
      %p101 = scmp.ne.s32.totalorder %s87, %s88
      %p102 = scmp.eq.s32.totalorder %s22, 1
      %p103 = por %p101, %p102
      %p105 = scmp.ne.s32.totalorder %s88, %s104
      %p106 = scmp.eq.s32.totalorder %s22, 0
      %p107 = por %p105, %p106
      %s108 = ssub.s32 %s25, %s41
      %p109 = scmp.eq.s32.totalorder %s108, 0
      %s111 = sadd.s32 %s110, 1
      %s112 = scalar_select %p109, %s110, %s111
      %p115 = pneg %p109
      %p116 = scmp.eq.s32.totalorder %s16, 1
      %p117 = por %p115, %p116
      %p118 = scmp.ne.s32.totalorder %s110, %s113
      %p119 = scmp.eq.s32.totalorder %s16, 0
      %p120 = por %p118, %p119
      %p121 = scmp.ne.s32.totalorder %s110, %s113
      %p122 = scmp.eq.s32.totalorder %s21, 1
      %p123 = por %p121, %p122
      %p124 = scmp.ne.s32.totalorder %s113, %s114
      %p125 = scmp.eq.s32.totalorder %s21, 0
      %p126 = por %p124, %p125
      %p127 = scmp.ne.s32.totalorder %s113, %s114
      %p128 = scmp.eq.s32.totalorder %s22, 1
      %p129 = por %p127, %p128
      %p131 = scmp.ne.s32.totalorder %s114, %s130
      %p132 = scmp.eq.s32.totalorder %s22, 0
      %p133 = por %p131, %p132
      %s134 = ssub.s32 %s23, %s49
      %s135 = ssub.s32 %s24, %s45
      %s136 = sor.u32 %s134, %s135
      %s137 = ssub.s32 %s25, %s41
      %s138 = sor.u32 %s136, %s137
      %p139 = scmp.eq.s32.totalorder %s138, 0
      %s141 = sadd.s32 %s140, 1
      %s142 = scalar_select %p139, %s140, %s141
      %p145 = pneg %p139
      %p146 = scmp.eq.s32.totalorder %s16, 1
      %p147 = por %p145, %p146
      %p148 = scmp.ne.s32.totalorder %s140, %s143
      %p149 = scmp.eq.s32.totalorder %s16, 0
      %p150 = por %p148, %p149
      %p151 = scmp.ne.s32.totalorder %s140, %s143
      %p152 = scmp.eq.s32.totalorder %s21, 1
      %p153 = por %p151, %p152
      %p154 = scmp.ne.s32.totalorder %s143, %s144
      %p155 = scmp.eq.s32.totalorder %s21, 0
      %p156 = por %p154, %p155
      %p157 = scmp.ne.s32.totalorder %s143, %s144
      %p158 = scmp.eq.s32.totalorder %s22, 1
      %p159 = por %p157, %p158
      %p161 = scmp.ne.s32.totalorder %s144, %s160
      %p162 = scmp.eq.s32.totalorder %s22, 0
      %p163 = por %p161, %p162
      %p164 = scmp.le.s32.totalorder 1, %s16
      %p165 = scmp.lt.s32.totalorder %s16, 3
      %p166 = pnand %p164, %p165
      %p167 = pneg %p166
      // Predicated region
      $region9: #{tpu_custom_call.1} parent=5 // pred_check
        _
      $region10: #{tpu_custom_call.1} parent=5 // pred_check_branch
        %169 = sbr.rel (%p166) target = $region12
      $region11: #{tpu_custom_call.1} parent=5 // pred_region
        %s170 = ssub.s32 %s16, 1
        // Predicated region
        $region13: #{tpu_custom_call.1} parent=11 // pred_check
          %p171 = pneg %p100
        $region14: #{tpu_custom_call.1} parent=11 // pred_check_branch
          %173 = sbr.rel (%p171) target = $region16
        $region15: #{tpu_custom_call.1} parent=11 // pred_region
          %s174 = smul.u32 16, %s30
          %s176 = ssub.s32 2048, 2048
          %177 = vsyncadd [#allocation7], %s176
          %s178 = sadd.s32 %s29, %s174
          %s179 = smul.addr %s178, 128
          %s180 = scalar_lea.hbm %s1, %s179
          %s181 = sshll.u32 [#allocation6], 4
          %s182 = int_to_ptr.vmem [resolvable:$true] %s181
          %187 = dma.hbm_to_vmem [thread:$0]  %s180, 2048, %s182, [#allocation7], 128, 128, 8
        $region16: #{tpu_custom_call.1} parent=11 // pred_fallthru
          _
        // Predicated region
        $region17: #{tpu_custom_call.1} parent=11 // pred_check
          %p188 = pneg %p126
        $region18: #{tpu_custom_call.1} parent=11 // pred_check_branch
          %190 = sbr.rel (%p188) target = $region20
        $region19: #{tpu_custom_call.1} parent=11 // pred_region
          %p191 = scmp.lt.s32.totalorder %s29, 0
          %s192 = scalar_select %p191, %s29, 0
          %s193 = scalar_lea.vmem %s2, %s192
        $region20: #{tpu_custom_call.1} parent=11 // pred_fallthru
          _
      $region12: #{tpu_custom_call.1} parent=5 // pred_fallthru
        _
      %p194 = scmp.lt.s32.totalorder %s16, 2
      // Predicated region
      $region21: #{tpu_custom_call.1} parent=5 // pred_check
        %p195 = pneg %p194
      $region22: #{tpu_custom_call.1} parent=5 // pred_check_branch
        %197 = sbr.rel (%p195) target = $region24
      $region23: #{tpu_custom_call.1} parent=5 // pred_region
        // Predicated region
        $region25: #{tpu_custom_call.1} parent=23 // pred_check
          %p198 = pneg %p66
        $region26: #{tpu_custom_call.1} parent=23 // pred_check_branch
          %200 = sbr.rel (%p198) target = $region28
        $region27: #{tpu_custom_call.1} parent=23 // pred_region
          %s201 = sand.u32 %s56, 1
          %s202 = scalar_lea.sflag [#allocation4], %s201
          %s203 = sand.u32 %s56, 1
          %s204 = smul.addr %s203, 64
          %s205 = scalar_lea.vmem [#allocation3], %s204
          %s206 = smul.u32 8, %s24
          %s208 = ssub.s32 1024, 1024
          %209 = vsyncadd %s202, %s208
          %s210 = sadd.s32 %s26, %s206
          %s211 = smul.addr %s23, 8
          %s212 = sadd.s32 %s210, %s211
          %s213 = smul.addr %s212, 128
          %s214 = scalar_lea.hbm %s0, %s213
          %s215 = sshll.u32 %s205, 4
          %s216 = int_to_ptr.vmem [resolvable:$true] %s215
          %221 = dma.hbm_to_vmem [thread:$0]  %s214, 1024, %s216, %s202, 128, 128, 8
        $region28: #{tpu_custom_call.1} parent=23 // pred_fallthru
          _
      $region24: #{tpu_custom_call.1} parent=5 // pred_fallthru
        _
      %p222 = scmp.le.s32.totalorder 1, %s16
      %p223 = scmp.lt.s32.totalorder %s16, 3
      %p224 = pnand %p222, %p223
      %p225 = pneg %p224
      // Predicated region
      $region29: #{tpu_custom_call.1} parent=5 // pred_check
        _
      $region30: #{tpu_custom_call.1} parent=5 // pred_check_branch
        %227 = sbr.rel (%p224) target = $region32
      $region31: #{tpu_custom_call.1} parent=5 // pred_region
        %s228 = ssub.s32 %s16, 1
        %s229 = sand.u32 %s59, 1
        %s230 = scalar_lea.sflag [#allocation4], %s229
        %s231 = sand.u32 %s59, 1
        %s232 = smul.addr %s231, 64
        %s233 = scalar_lea.vmem [#allocation3], %s232
        // Predicated region
        $region33: #{tpu_custom_call.1} parent=31 // pred_check
          %p234 = pneg %p72
        $region34: #{tpu_custom_call.1} parent=31 // pred_check_branch
          %236 = sbr.rel (%p234) target = $region36
        $region35: #{tpu_custom_call.1} parent=31 // pred_region
          %237 = dma.done %s230, 1024
        $region36: #{tpu_custom_call.1} parent=31 // pred_fallthru
          _
        // Predicated region
        $region37: #{tpu_custom_call.1} parent=31 // pred_check
          %p238 = pneg %p100
        $region38: #{tpu_custom_call.1} parent=31 // pred_check_branch
          %240 = sbr.rel (%p238) target = $region40
        $region39: #{tpu_custom_call.1} parent=31 // pred_region
          %241 = dma.done [#allocation7], 2048
        $region40: #{tpu_custom_call.1} parent=31 // pred_fallthru
          _
        %s242 = sand.u32 %s59, 1
        %s243 = scalar_lea.sflag [#allocation4], %s242
        %s244 = sand.u32 %s59, 1
        %s245 = smul.addr %s244, 64
        %s246 = scalar_lea.vmem [#allocation3], %s245
        %p247 = pneg %p72
        %p248 = pneg %p69
        %p249 = pneg %p100
        %p250 = pneg %p97
        %p251 = scmp.lt.s32.totalorder %s29, 0
        %s252 = scalar_select %p251, %s29, 0
        %s253 = scalar_lea.vmem %s2, %s252
        %p254 = pneg %p126
        %p255 = pneg %p123
        %p256 = pneg %p156
        %p257 = pneg %p153
        %s258 = sand.u32 %s143, 1
        %s259 = scalar_lea.sflag [#allocation5], %s258
        %s260 = sand.u32 %s143, 1
        %s261 = smul.addr %s260, 64
        %s262 = scalar_lea.vmem [#allocation8], %s261
        %s263 = smul.u32 8, %s28
        %s264 = smul.u32 16, %s30
        %p265 = scmp.lt.s32.totalorder %s29, 0
        %s266 = scalar_select %p265, %s29, 0
        %s267 = scalar_lea.vmem %s2, %s266
        %s268 = smul.u32 8, %s28
        %p269 = scmp.eq.s32.totalorder %s30, 0
        // Predicated region
        $region41: #{tpu_custom_call.1} parent=31 // pred_check
          %p270 = pneg %p269
        $region42: #{tpu_custom_call.1} parent=31 // pred_check_branch
          %272 = sbr.rel (%p270) target = $region44
        $region43: #{tpu_custom_call.1} parent=31 // pred_region
          %273 = vst [vmem:[#allocation2] sm:$0xff] 0.0
          %274 = vst [vmem:[#allocation2 + $0x8] sm:$0xff] 0.0
          %275 = vst [vmem:[#allocation2 + $0x10] sm:$0xff] 0.0
          %276 = vst [vmem:[#allocation2 + $0x18] sm:$0xff] 0.0
          %277 = vst [vmem:[#allocation2 + $0x20] sm:$0xff] 0.0
          %278 = vst [vmem:[#allocation2 + $0x28] sm:$0xff] 0.0
          %279 = vst [vmem:[#allocation2 + $0x30] sm:$0xff] 0.0
          %280 = vst [vmem:[#allocation2 + $0x38] sm:$0xff] 0.0
        $region44: #{tpu_custom_call.1} parent=31 // pred_fallthru
          _
        %v281 = vld [vmem:[#allocation2] sm:$0xff]
        %v282 = vld [vmem:[#allocation2 + $0x8] sm:$0xff]
        %v283 = vld [vmem:[#allocation2 + $0x10] sm:$0xff]
        %v284 = vld [vmem:[#allocation2 + $0x18] sm:$0xff]
        %v285 = vld [vmem:[#allocation2 + $0x20] sm:$0xff]
        %v286 = vld [vmem:[#allocation2 + $0x28] sm:$0xff]
        %v287 = vld [vmem:[#allocation2 + $0x30] sm:$0xff]
        %v288 = vld [vmem:[#allocation2 + $0x38] sm:$0xff]
        %v289 = vld [vmem:[%s233] sm:$0xff]
        %v290 = vld [vmem:[%s233 + $0x8] sm:$0xff]
        %v291 = vld [vmem:[%s233 + $0x10] sm:$0xff]
        %v292 = vld [vmem:[%s233 + $0x18] sm:$0xff]
        %v293 = vld [vmem:[%s233 + $0x20] sm:$0xff]
        %v294 = vld [vmem:[%s233 + $0x28] sm:$0xff]
        %v295 = vld [vmem:[%s233 + $0x30] sm:$0xff]
        %v296 = vld [vmem:[%s233 + $0x38] sm:$0xff]
        %v297 = vld [vmem:[#allocation6] sm:$0xff]
        %v298 = vld [vmem:[#allocation6 + $0x8] sm:$0xff]
        %v299 = vld [vmem:[#allocation6 + $0x10] sm:$0xff]
        %v300 = vld [vmem:[#allocation6 + $0x18] sm:$0xff]
        %v301 = vld [vmem:[#allocation6 + $0x20] sm:$0xff]
        %v302 = vld [vmem:[#allocation6 + $0x28] sm:$0xff]
        %v303 = vld [vmem:[#allocation6 + $0x30] sm:$0xff]
        %v304 = vld [vmem:[#allocation6 + $0x38] sm:$0xff]
        %v305 = vld [vmem:[#allocation6 + $0x40] sm:$0xff]
        %v306 = vld [vmem:[#allocation6 + $0x48] sm:$0xff]
        %v307 = vld [vmem:[#allocation6 + $0x50] sm:$0xff]
        %v308 = vld [vmem:[#allocation6 + $0x58] sm:$0xff]
        %v309 = vld [vmem:[#allocation6 + $0x60] sm:$0xff]
        %v310 = vld [vmem:[#allocation6 + $0x68] sm:$0xff]
        %v311 = vld [vmem:[#allocation6 + $0x70] sm:$0xff]
        %v312 = vld [vmem:[#allocation6 + $0x78] sm:$0xff]
        %313 = vmatprep.subr.mxu0 0.0
        %314 = vmatpush1.msra.mxu0 %v297
        %315 = vmatprep.subr.mxu0 0.0
        %316 = vmatpush1.msra.mxu0 %v298
        %317 = vmatprep.subr.mxu0 0.0
        %318 = vmatpush1.msra.mxu0 %v299
        %319 = vmatprep.subr.mxu0 0.0
        %320 = vmatpush1.msra.mxu0 %v300
        %321 = vmatprep.subr.mxu0 0.0
        %322 = vmatpush1.msra.mxu0 %v301
        %323 = vmatprep.subr.mxu0 0.0
        %324 = vmatpush1.msra.mxu0 %v302
        %325 = vmatprep.subr.mxu0 0.0
        %326 = vmatpush1.msra.mxu0 %v303
        %327 = vmatprep.subr.mxu0 0.0
        %328 = vmatpush1.msra.mxu0 %v304
        %329 = vmatprep.subr.mxu0 0.0
        %330 = vmatpush1.msra.mxu0 %v305
        %331 = vmatprep.subr.mxu0 0.0
        %332 = vmatpush1.msra.mxu0 %v306
        %333 = vmatprep.subr.mxu0 0.0
        %334 = vmatpush1.msra.mxu0 %v307
        %335 = vmatprep.subr.mxu0 0.0
        %336 = vmatpush1.msra.mxu0 %v308
        %337 = vmatprep.subr.mxu0 0.0
        %338 = vmatpush1.msra.mxu0 %v309
        %339 = vmatprep.subr.mxu0 0.0
        %340 = vmatpush1.msra.mxu0 %v310
        %341 = vmatprep.subr.mxu0 0.0
        %342 = vmatpush1.msra.mxu0 %v311
        %343 = vmatprep.subr.mxu0 0.0
        %344 = vmatpush1.msra.mxu0 %v312
        %345 = vmatprep.subr.mxu0 0.0
        %346 = vmatpush1.msra.mxu0 0.0
        %347 = vmatprep.subr.mxu0 0.0
        %348 = vmatpush1.msra.mxu0 0.0
        %349 = vmatprep.subr.mxu0 0.0
        %350 = vmatpush1.msra.mxu0 0.0
        %351 = vmatprep.subr.mxu0 0.0
        %352 = vmatpush1.msra.mxu0 0.0
        %353 = vmatprep.subr.mxu0 0.0
        %354 = vmatpush1.msra.mxu0 0.0
        %355 = vmatprep.subr.mxu0 0.0
        %356 = vmatpush1.msra.mxu0 0.0
        %357 = vmatprep.subr.mxu0 0.0
        %358 = vmatpush1.msra.mxu0 0.0
        %359 = vmatprep.subr.mxu0 0.0
        %360 = vmatpush1.msra.mxu0 0.0
        %361 = vmatprep.subr.mxu0 0.0
        %362 = vmatpush1.msra.mxu0 0.0
        %363 = vmatprep.subr.mxu0 0.0
        %364 = vmatpush1.msra.mxu0 0.0
        %365 = vmatprep.subr.mxu0 0.0
        %366 = vmatpush1.msra.mxu0 0.0
        %367 = vmatprep.subr.mxu0 0.0
        %368 = vmatpush1.msra.mxu0 0.0
        %369 = vmatprep.subr.mxu0 0.0
        %370 = vmatpush1.msra.mxu0 0.0
        %371 = vmatprep.subr.mxu0 0.0
        %372 = vmatpush1.msra.mxu0 0.0
        %373 = vmatprep.subr.mxu0 0.0
        %374 = vmatpush1.msra.mxu0 0.0
        %375 = vmatprep.subr.mxu0 0.0
        %376 = vmatpush1.msra.mxu0 0.0
        %377 = vmatprep.mubr.f32.mxu0 0.0
        %378 = vmatmul.mubr.f32.gmra.mrb[0].mxu0 %v289
        %v379 = vpop.f32.mrb[0].mxu0
        %v380 = vadd.f32 0.0, %v379
        %v381 = vpop.f32.mrb[0].mxu0
        %382 = vmatprep.mubr.f32.mxu0 0.0
        %383 = vmatmul.mubr.f32.gmra.mrb[0].mxu0 %v290
        %v384 = vpop.f32.mrb[0].mxu0
        %v385 = vadd.f32 0.0, %v384
        %v386 = vpop.f32.mrb[0].mxu0
        %387 = vmatprep.mubr.f32.mxu0 0.0
        %388 = vmatmul.mubr.f32.gmra.mrb[0].mxu0 %v291
        %v389 = vpop.f32.mrb[0].mxu0
        %v390 = vadd.f32 0.0, %v389
        %v391 = vpop.f32.mrb[0].mxu0
        %392 = vmatprep.mubr.f32.mxu0 0.0
        %393 = vmatmul.mubr.f32.gmra.mrb[0].mxu0 %v292
        %v394 = vpop.f32.mrb[0].mxu0
        %v395 = vadd.f32 0.0, %v394
        %v396 = vpop.f32.mrb[0].mxu0
        %397 = vmatprep.mubr.f32.mxu0 0.0
        %398 = vmatmul.mubr.f32.gmra.mrb[0].mxu0 %v293
        %v399 = vpop.f32.mrb[0].mxu0
        %v400 = vadd.f32 0.0, %v399
        %v401 = vpop.f32.mrb[0].mxu0
        %402 = vmatprep.mubr.f32.mxu0 0.0
        %403 = vmatmul.mubr.f32.gmra.mrb[0].mxu0 %v294
        %v404 = vpop.f32.mrb[0].mxu0
        %v405 = vadd.f32 0.0, %v404
        %v406 = vpop.f32.mrb[0].mxu0
        %407 = vmatprep.mubr.f32.mxu0 0.0
        %408 = vmatmul.mubr.f32.gmra.mrb[0].mxu0 %v295
        %v409 = vpop.f32.mrb[0].mxu0
        %v410 = vadd.f32 0.0, %v409
        %v411 = vpop.f32.mrb[0].mxu0
        %412 = vmatprep.mubr.f32.mxu0 0.0
        %413 = vmatmul.mubr.f32.gmra.mrb[0].mxu0 %v296
        %v414 = vpop.f32.mrb[0].mxu0
        %v415 = vadd.f32 0.0, %v414
        %v416 = vpop.f32.mrb[0].mxu0
        %417 = vdwg.mxu0
        %v418 = vadd.f32 %v281, %v380
        %v419 = vadd.f32 %v282, %v385
        %v420 = vadd.f32 %v283, %v390
        %v421 = vadd.f32 %v284, %v395
        %v422 = vadd.f32 %v285, %v400
        %v423 = vadd.f32 %v286, %v405
        %v424 = vadd.f32 %v287, %v410
        %v425 = vadd.f32 %v288, %v415
        %426 = vst [vmem:[#allocation2] sm:$0xff] %v418
        %427 = vst [vmem:[#allocation2 + $0x8] sm:$0xff] %v419
        %428 = vst [vmem:[#allocation2 + $0x10] sm:$0xff] %v420
        %429 = vst [vmem:[#allocation2 + $0x18] sm:$0xff] %v421
        %430 = vst [vmem:[#allocation2 + $0x20] sm:$0xff] %v422
        %431 = vst [vmem:[#allocation2 + $0x28] sm:$0xff] %v423
        %432 = vst [vmem:[#allocation2 + $0x30] sm:$0xff] %v424
        %433 = vst [vmem:[#allocation2 + $0x38] sm:$0xff] %v425
        // Predicated region
        $region45: #{tpu_custom_call.1} parent=31 // pred_check
          %p434 = pneg %p269
        $region46: #{tpu_custom_call.1} parent=31 // pred_check_branch
          %436 = sbr.rel (%p434) target = $region48
        $region47: #{tpu_custom_call.1} parent=31 // pred_region
          %v437 = vld [vmem:[#allocation2] sm:$0xff]
          %v438 = vld [vmem:[#allocation2 + $0x8] sm:$0xff]
          %v439 = vld [vmem:[#allocation2 + $0x10] sm:$0xff]
          %v440 = vld [vmem:[#allocation2 + $0x18] sm:$0xff]
          %v441 = vld [vmem:[#allocation2 + $0x20] sm:$0xff]
          %v442 = vld [vmem:[#allocation2 + $0x28] sm:$0xff]
          %v443 = vld [vmem:[#allocation2 + $0x30] sm:$0xff]
          %v444 = vld [vmem:[#allocation2 + $0x38] sm:$0xff]
          %v445 = vld [vmem:[%s267] sm:$0x1]
          %v447 = vlaneseq
          %v448 = vshrl.u32 %v447, 7
          %v449 = vsub.s32 0, %v448
          %v450 = vrot.slane %v445, %v449
          %v452 = vadd.f32 %v437, %v450
          %v453 = vadd.f32 %v438, %v450
          %v454 = vadd.f32 %v439, %v450
          %v455 = vadd.f32 %v440, %v450
          %v456 = vadd.f32 %v441, %v450
          %v457 = vadd.f32 %v442, %v450
          %v458 = vadd.f32 %v443, %v450
          %v459 = vadd.f32 %v444, %v450
          %460 = vst [vmem:[%s262] sm:$0xff] %v452
          %461 = vst [vmem:[%s262 + $0x8] sm:$0xff] %v453
          %462 = vst [vmem:[%s262 + $0x10] sm:$0xff] %v454
          %463 = vst [vmem:[%s262 + $0x18] sm:$0xff] %v455
          %464 = vst [vmem:[%s262 + $0x20] sm:$0xff] %v456
          %465 = vst [vmem:[%s262 + $0x28] sm:$0xff] %v457
          %466 = vst [vmem:[%s262 + $0x30] sm:$0xff] %v458
          %467 = vst [vmem:[%s262 + $0x38] sm:$0xff] %v459
        $region48: #{tpu_custom_call.1} parent=31 // pred_fallthru
          _
        %s468 = sand.u32 %s143, 1
        %s469 = scalar_lea.sflag [#allocation5], %s468
        %s470 = sand.u32 %s143, 1
        %s471 = smul.addr %s470, 64
        %s472 = scalar_lea.vmem [#allocation8], %s471
        // Predicated region
        $region49: #{tpu_custom_call.1} parent=31 // pred_check
          %p473 = pneg %p153
        $region50: #{tpu_custom_call.1} parent=31 // pred_check_branch
          %475 = sbr.rel (%p473) target = $region52
        $region51: #{tpu_custom_call.1} parent=31 // pred_region
          %s476 = smul.u32 8, %s28
          %s478 = ssub.s32 1024, 1024
          %479 = vsyncadd %s469, %s478
          %s480 = sadd.s32 %s29, %s476
          %s481 = smul.addr %s27, 8
          %s482 = sadd.s32 %s480, %s481
          %s483 = smul.addr %s482, 128
          %s484 = scalar_lea.hbm %s3, %s483
          %s485 = sshll.u32 %s472, 4
          %s486 = int_to_ptr.vmem [resolvable:$true] %s485
          %491 = dma.vmem_to_hbm [thread:$0]  %s486, 1024, %s484, %s469, 128, 128, 8
        $region52: #{tpu_custom_call.1} parent=31 // pred_fallthru
          _
      $region32: #{tpu_custom_call.1} parent=5 // pred_fallthru
        _
      %p492 = scmp.le.s32.totalorder 2, %s16
      // Predicated region
      $region53: #{tpu_custom_call.1} parent=5 // pred_check
        %p493 = pneg %p492
      $region54: #{tpu_custom_call.1} parent=5 // pred_check_branch
        %495 = sbr.rel (%p493) target = $region56
      $region55: #{tpu_custom_call.1} parent=5 // pred_region
        %s496 = ssub.s32 %s16, 2
        // Predicated region
        $region57: #{tpu_custom_call.1} parent=55 // pred_check
          %p497 = pneg %p159
        $region58: #{tpu_custom_call.1} parent=55 // pred_check_branch
          %499 = sbr.rel (%p497) target = $region60
        $region59: #{tpu_custom_call.1} parent=55 // pred_region
          %s500 = sand.u32 %s144, 1
          %s501 = scalar_lea.sflag [#allocation5], %s500
          %s502 = sand.u32 %s144, 1
          %s503 = smul.addr %s502, 64
          %s504 = scalar_lea.vmem [#allocation8], %s503
          %505 = dma.done %s501, 1024
        $region60: #{tpu_custom_call.1} parent=55 // pred_fallthru
          _
      $region56: #{tpu_custom_call.1} parent=5 // pred_fallthru
        _
    $region6: #{tpu_custom_call.1} parent=1 // loop_footer
      %s20 = sadd.s32 1, %s16
    $region7: #{tpu_custom_call.1} parent=1 // loop_footer_branch
      %15 = sbr.rel target = $region3
    $region8: #{tpu_custom_call.1} parent=1 // loop_exit
      _
    %506 = vsyncpa [#allocation4], 1
    %s507 = scalar_lea.sflag [#allocation4], 1
    %508 = vsyncpa %s507, 1
    %509 = vsyncpa [#allocation7], 1
    %510 = vsyncpa [#allocation5], 1
    %s511 = scalar_lea.sflag [#allocation5], 1
    %512 = vsyncpa %s511, 1

</llo_original>
